<compile_context>
chip_gen: v7x
topology: tpu7x:2x2x1
jax: 0.10.0
libtpu: 0.0.40
codegen_flags: <defaults>
</compile_context>

<pallas_src>
import jax
import jax.numpy as jnp
from jax.experimental import pallas as pl
from jax.experimental.pallas import tpu as pltpu

BATCH = 8
IN_DIM = 1
HIDDEN = 100
HIDDEN_PAD = 128   # lane-aligned hidden width (one f32 vreg lane extent)
OUT_DIM = 1


def mlp_kernel(x_ref, w1_ref, b1_ref, w2_ref, b2_ref, o_ref):
    x = x_ref[...]                                     # (Bp, 1)
    w1 = w1_ref[...]                                   # (1, Hp)
    b1 = b1_ref[...]                                   # (1, Hp)
    w2 = w2_ref[...]                                   # (1, Hp)  (W2 column, transposed)
    b2 = b2_ref[...]                                   # (1, 1)

    # Layer 1 + ReLU: broadcast outer product, all VPU.
    h = jnp.maximum(x * w1 + b1, 0.0)                  # (Bp, Hp)
    # Layer 2: elementwise mul (VPU) + lane reduce (XLU) + bias.
    y = jnp.sum(h * w2, axis=-1, keepdims=True) + b2   # (Bp, 1)
    o_ref[...] = y.astype(o_ref.dtype)


def _forward_impl(x, w1, b1, w2, b2):
    """x: (B, 1); w1: (1, H); b1: (1, H); w2: (H, 1); b2: (1, 1)."""
    B = x.shape[0]
    Bp = ((B + 7) // 8) * 8          # sublane-align batch
    Hp = HIDDEN_PAD

    # Zero-pad hidden dim to 128 lanes; pad batch to a multiple of 8 sublanes.
    # These pads fuse into the surrounding jit and are tiny (KiB scale).
    w1p = jnp.zeros((IN_DIM, Hp), jnp.float32).at[:, :HIDDEN].set(w1)
    b1p = jnp.zeros((1, Hp), jnp.float32).at[:, :HIDDEN].set(b1)
    w2p = jnp.zeros((1, Hp), jnp.float32).at[:, :HIDDEN].set(w2.T)
    xp = jnp.zeros((Bp, IN_DIM), jnp.float32).at[:B].set(x)

    # Whole arrays resident in VMEM, single invocation (grid=()).
    vmem = pl.BlockSpec(memory_space=pltpu.MemorySpace.VMEM)
    out = pl.pallas_call(
        mlp_kernel,
        out_shape=jax.ShapeDtypeStruct((Bp, OUT_DIM), jnp.float32),
        in_specs=[vmem, vmem, vmem, vmem, vmem],
        out_specs=vmem,
    )(xp, w1p, b1p, w2p, b2)
    return out[:B]


# Jit the whole forward so padding / slicing fuse around the pallas_call.
my_cnn_forward = jax.jit(_forward_impl)


def init_params(key):
    # Deterministic init mimicking PyTorch nn.Linear default:
    # U(-1/sqrt(fan_in), 1/sqrt(fan_in)); stored as (in, out) so y = x @ W + b.
    k1, k2, k3, k4 = jax.random.split(key, 4)
    bound1 = 1.0 / (IN_DIM ** 0.5)
    bound2 = 1.0 / (HIDDEN ** 0.5)
    w1 = jax.random.uniform(k1, (IN_DIM, HIDDEN), jnp.float32, -bound1, bound1)
    b1 = jax.random.uniform(k2, (1, HIDDEN), jnp.float32, -bound1, bound1)
    w2 = jax.random.uniform(k3, (HIDDEN, OUT_DIM), jnp.float32, -bound2, bound2)
    b2 = jax.random.uniform(k4, (1, OUT_DIM), jnp.float32, -bound2, bound2)
    return w1, b1, w2, b2


if __name__ == "__main__":
    key = jax.random.PRNGKey(0)
    kx, kp = jax.random.split(key)
    x = jax.random.normal(kx, (BATCH, IN_DIM), jnp.float32)
    w1, b1, w2, b2 = init_params(kp)

    out = my_cnn_forward(x, w1, b1, w2, b2)
    jax.block_until_ready(out)

    # Reference check in plain JAX (same math as PyTorch Linear/relu/Linear).
    ref = jnp.maximum(x @ w1 + b1, 0.0) @ w2 + b2
    assert out.shape == (BATCH, OUT_DIM)
    assert jnp.allclose(out, ref, atol=1e-5, rtol=1e-5)

    print("KERNEL_OK")
</pallas_src>

<mosaic_0001>
module attributes {stable_mosaic.version = 11 : i64} {
  func.func @mlp_kernel(%arg0: memref<8x1xf32, #tpu.memory_space<vmem>>, %arg1: memref<1x128xf32, #tpu.memory_space<vmem>>, %arg2: memref<1x128xf32, #tpu.memory_space<vmem>>, %arg3: memref<1x128xf32, #tpu.memory_space<vmem>>, %arg4: memref<1x1xf32, #tpu.memory_space<vmem>>, %arg5: memref<8x1xf32, #tpu.memory_space<vmem>>) attributes {dimension_semantics = [], scalar_prefetch = 0 : i64, scratch_operands = 0 : i64, tpu.core_type = #tpu.core_type<tc>} {
    %c0 = arith.constant 0 : index
    %c0_0 = arith.constant 0 : index
    %0 = vector.load %arg0[%c0, %c0_0] : memref<8x1xf32, #tpu.memory_space<vmem>>, vector<8x1xf32>
    %c0_1 = arith.constant 0 : index
    %c0_2 = arith.constant 0 : index
    %1 = vector.load %arg1[%c0_1, %c0_2] : memref<1x128xf32, #tpu.memory_space<vmem>>, vector<1x128xf32>
    %c0_3 = arith.constant 0 : index
    %c0_4 = arith.constant 0 : index
    %2 = vector.load %arg2[%c0_3, %c0_4] : memref<1x128xf32, #tpu.memory_space<vmem>>, vector<1x128xf32>
    %c0_5 = arith.constant 0 : index
    %c0_6 = arith.constant 0 : index
    %3 = vector.load %arg3[%c0_5, %c0_6] : memref<1x128xf32, #tpu.memory_space<vmem>>, vector<1x128xf32>
    %c0_7 = arith.constant 0 : index
    %c0_8 = arith.constant 0 : index
    %4 = vector.load %arg4[%c0_7, %c0_8] : memref<1x1xf32, #tpu.memory_space<vmem>>, vector<1x1xf32>
    %5 = vector.broadcast %0 : vector<8x1xf32> to vector<8x128xf32>
    %6 = vector.broadcast %1 : vector<1x128xf32> to vector<8x128xf32>
    %7 = arith.mulf %5, %6 : vector<8x128xf32>
    %8 = vector.broadcast %2 : vector<1x128xf32> to vector<8x128xf32>
    %9 = arith.addf %7, %8 : vector<8x128xf32>
    %cst = arith.constant 0.000000e+00 : f32
    %10 = vector.broadcast %cst : f32 to vector<8x128xf32>
    %11 = arith.maximumf %9, %10 : vector<8x128xf32>
    %12 = vector.broadcast %3 : vector<1x128xf32> to vector<8x128xf32>
    %13 = arith.mulf %11, %12 : vector<8x128xf32>
    %cst_9 = arith.constant dense<0.000000e+00> : vector<8xf32>
    %14 = vector.multi_reduction <add>, %13, %cst_9 [1] : vector<8x128xf32> to vector<8xf32>
    %15 = vector.shape_cast %14 : vector<8xf32> to vector<8x1xf32>
    %16 = vector.broadcast %4 : vector<1x1xf32> to vector<8x1xf32>
    %17 = arith.addf %15, %16 : vector<8x1xf32>
    %c0_10 = arith.constant 0 : index
    %c0_11 = arith.constant 0 : index
    %18 = vector.load %arg5[%c0_10, %c0_11] : memref<8x1xf32, #tpu.memory_space<vmem>>, vector<8x1xf32>
    tpu.vector_store %arg5[%c0_10, %c0_11], %17 {strides = array<i32>} : memref<8x1xf32, #tpu.memory_space<vmem>>, vector<8x1xf32>,
    return
  }
}

</mosaic_0001>

<llo_original>
// kernel: _forward_impl.1
$region0: #{_forward_impl.1}
  #allocation0 [shape = 'u32[]', space=smem, size = 0x4, offset = 0x4, fixed_abs, tag = 'smem constant byte address 0x4 - core index']
  #allocation1 [shape = 'u32[144,128]{1,0:T(1,128)}', space=vmem, size = 0x12000, scoped, tag = 'internal scratch']
  #allocation2 [shape = 'f32[1,1]{1,0:T(1,128)S(1)}', space=vmem, size = 0x200, scoped, tag = 'scoped memory for _forward_impl.1']
  %s0 = inlined_call_operand.vmem [shape: f32[8,1], index: 0, kind: input, shape index: {}]
  %s1 = inlined_call_operand.vmem [shape: f32[1,128], index: 1, kind: input, shape index: {}]
  %s2 = inlined_call_operand.vmem [shape: f32[1,128], index: 2, kind: input, shape index: {}]
  %s3 = inlined_call_operand.vmem [shape: f32[1,128], index: 3, kind: input, shape index: {}]
  %s4 = inlined_call_operand.<no memory space> [shape: f32[1,1], index: 4, kind: input, shape index: {}]
  %s5 = inlined_call_operand.vmem [shape: f32[8,1], index: 5, kind: output, shape index: {}]
  %s6 = sld [smem:[#allocation0]]
  $region30: #{_forward_impl.1} parent=0
    _
  %s8 = ssub.s32 1, %s6
  %s9 = scalar_select 0, %s8, %s6
  %v10 = vstv %s4
  %11 = vst [vmem:[#allocation2] sm:$0x1] %v10
  // Predicated region
  $region2: #{_forward_impl.1} parent=0 // pred_check
    _
  $region3: #{_forward_impl.1} parent=0 // pred_check_branch
    %13 = sbr.rel (0) target = $region5
  $region4: #{_forward_impl.1} parent=0 // pred_region
    _
  $region5: #{_forward_impl.1} parent=0 // pred_fallthru
    _
  // Predicated region
  $region6: #{_forward_impl.1} parent=0 // pred_check
    _
  $region7: #{_forward_impl.1} parent=0 // pred_check_branch
    %15 = sbr.rel (0) target = $region9
  $region8: #{_forward_impl.1} parent=0 // pred_region
    _
  $region9: #{_forward_impl.1} parent=0 // pred_fallthru
    _
  // Predicated region
  $region10: #{_forward_impl.1} parent=0 // pred_check
    _
  $region11: #{_forward_impl.1} parent=0 // pred_check_branch
    %17 = sbr.rel (0) target = $region13
  $region12: #{_forward_impl.1} parent=0 // pred_region
    _
  $region13: #{_forward_impl.1} parent=0 // pred_fallthru
    _
  // Predicated region
  $region14: #{_forward_impl.1} parent=0 // pred_check
    _
  $region15: #{_forward_impl.1} parent=0 // pred_check_branch
    %19 = sbr.rel (0) target = $region17
  $region16: #{_forward_impl.1} parent=0 // pred_region
    _
  $region17: #{_forward_impl.1} parent=0 // pred_fallthru
    _
  // Predicated region
  $region18: #{_forward_impl.1} parent=0 // pred_check
    _
  $region19: #{_forward_impl.1} parent=0 // pred_check_branch
    %21 = sbr.rel (0) target = $region21
  $region20: #{_forward_impl.1} parent=0 // pred_region
    _
  $region21: #{_forward_impl.1} parent=0 // pred_fallthru
    _
  %v22 = vld [vmem:[%s0] sm:$0xff]
  %v23 = vld [vmem:[%s1] sm:$0x1]
  %v24 = vld [vmem:[%s2] sm:$0x1]
  %v25 = vld [vmem:[%s3] sm:$0x1]
  %v26 = vld [vmem:[#allocation2] sm:$0x1]
  %28 = vset.pattern.permute.xlu0 0
  %29 = vperm.xlu0 %28, %v22
  %v30 = vpop.permute.xlu0 %29
  %v33 = vlaneseq
  %v34 = vshrl.u32 %v33, 7
  %v35 = vsub.s32 0, %v34
  %v36 = vrot.slane %v23, %v35
  %v38 = vmul.f32 %v30, %v36
  %v40 = vlaneseq
  %v41 = vshrl.u32 %v40, 7
  %v42 = vsub.s32 0, %v41
  %v43 = vrot.slane %v24, %v42
  %v45 = vadd.f32 %v38, %v43
  %v46 = vmax.f32 %v45, 0.0
  %v48 = vlaneseq
  %v49 = vshrl.u32 %v48, 7
  %v50 = vsub.s32 0, %v49
  %v51 = vrot.slane %v25, %v50
  %v53 = vmul.f32 %v46, %v51
  %54 = vadd.xlane.f32.xlu0 %v53
  %v55 = vpop.xlane.xlu0 %54
  %v57 = vlaneseq
  %v58 = vshrl.u32 %v57, 7
  %v59 = vsub.s32 0, %v58
  %v60 = vrot.slane %v26, %v59
  %v62 = vadd.f32 %v55, %v60
  %vm63 = vcmask 7168
  %64 = vst.msk [vmem:[%s5] sm:$0xff] %vm63, %v62
  // Predicated region
  $region22: #{_forward_impl.1} parent=0 // pred_check
    _
  $region23: #{_forward_impl.1} parent=0 // pred_check_branch
    %66 = sbr.rel (0) target = $region25
  $region24: #{_forward_impl.1} parent=0 // pred_region
    _
  $region25: #{_forward_impl.1} parent=0 // pred_fallthru
    _
  // Predicated region
  $region26: #{_forward_impl.1} parent=0 // pred_check
    _
  $region27: #{_forward_impl.1} parent=0 // pred_check_branch
    %68 = sbr.rel (0) target = $region29
  $region28: #{_forward_impl.1} parent=0 // pred_region
    _
  $region29: #{_forward_impl.1} parent=0 // pred_fallthru
    _

</llo_original>
